<compile_context>
chip_gen: v5e
topology: v5e:2x2
jax: 0.10.0
libtpu: 0.0.40
codegen_flags: <defaults>
</compile_context>

<pallas_src>
import jax
import jax.numpy as jnp
from jax.experimental import pallas as pl
from jax.experimental.pallas import tpu as pltpu


# Rows of the packed small-parameter operand pk (f32[8, 3k]).
_ROW_B1 = 0   # conv1 bias, tiled k times
_ROW_B2 = 1   # conv2 bias, tiled k times
_ROW_WF = 2   # fc1 weight / H (avg-pool folded), tiled k times
_ROW_BF = 3   # fc1 bias at column 0
_PK_ROWS = 8


def _model_cell2_kernel(x_ref, w1_ref, w2_ref, pk_ref, pt_ref, o_ref):
    # x_ref : (F, LANE)    lane-folded input rows (stream dtype)
    # w1_ref: (LANE, 3k)   block-diagonal conv1 weight (stream dtype, resident)
    # w2_ref: (3k, 3k)     block-diagonal conv2 weight (f32, resident)
    # pk_ref: (8, 3k)      packed small params (f32, resident)
    # pt_ref: (s_tile, F)  0/1 pooling matrix (f32, resident)
    # o_ref : (s_tile, 1)  per-sample outputs (f32)
    b1 = pk_ref[_ROW_B1:_ROW_B1 + 1, :]          # (1, 3k)
    b2 = pk_ref[_ROW_B2:_ROW_B2 + 1, :]          # (1, 3k)
    wf = pk_ref[_ROW_WF:_ROW_WF + 1, :]          # (1, 3k), already / H
    bf = pk_ref[_ROW_BF:_ROW_BF + 1, 0:1]        # (1, 1)

    # conv1 (1 x M conv over markers), k cells per lane-row: one MXU matmul
    # with K = LANE (128), N = 3k (48) against the block-diagonal weight.
    y1 = jnp.dot(x_ref[...], w1_ref[...],
                 preferred_element_type=jnp.float32) + b1
    y1 = jnp.maximum(y1, 0.0)                    # (F, 3k) f32

    # conv2 (1x1 conv == 3x3 channel mix) as a block-diagonal MXU matmul.
    y2 = jnp.dot(y1, w2_ref[...],
                 preferred_element_type=jnp.float32) + b2
    y2 = jnp.maximum(y2, 0.0)                    # (F, 3k) f32

    # Fused AvgPool(H) + fc1: 0/1 pooling matmul on the MXU (K = F, large),
    # then one small lane reduction applying wf (1/H folded in) and the bias.
    pooled = jnp.dot(pt_ref[...], y2,
                     preferred_element_type=jnp.float32)          # (s_tile, 3k)
    o_ref[...] = jnp.sum(pooled * wf, axis=-1, keepdims=True) + bf  # (s_tile, 1)


def model_cell2_forward(x_nchw, params, *, samples_per_step=32,
                        stream_dtype=jnp.float32):
    """x_nchw: (N, 1, H, M) float32.  Returns (N, 1) float32.

    samples_per_step: samples per grid step (rounded up to a multiple of 8).
      Pick it so one input tile is ~1-4 MB and num_tiles >= 2 on v7x.
    stream_dtype: HBM dtype for x / conv1 weight (f32 or bf16); all in-kernel
      accumulation stays in f32.
    """
    w1, b1, w2, b2, wf, bf = params
    N, C, H, M = x_nchw.shape
    assert C == 1

    # ---- lane-folding geometry -------------------------------------------
    if M <= 128:
        m_pad = 1
        while m_pad < M:
            m_pad *= 2                 # next power of two >= M (divides 128)
        k = 128 // m_pad               # cells folded per lane-row
    else:
        m_pad = ((M + 127) // 128) * 128
        k = 1
    while H % k:                       # folding must not straddle a sample
        k //= 2
    lane = k * m_pad                   # minor dim of the folded input (<=128)
    fs = H // k                        # folded rows per sample
    ch = 3 * k                         # folded channel lanes

    # ---- sample tiling (whole samples per tile, sublane aligned) ----------
    s_tile = max(1, min(int(samples_per_step), N))
    s_tile = ((s_tile + 7) // 8) * 8   # multiple of 8 -> all specs (8,128) ok
    num_tiles = int(pl.cdiv(N, s_tile))
    n_pad = num_tiles * s_tile
    f_tile = s_tile * fs               # folded rows per grid step

    # ---- host-side repack of x: (N,1,H,M) -> (N_pad*H/k, lane) ------------
    x_rows = x_nchw.reshape(N * H, M).astype(jnp.float32)
    x_rows = jnp.pad(x_rows, ((0, (n_pad - N) * H), (0, m_pad - M)))
    x_folded = x_rows.reshape(n_pad * H // k, lane).astype(stream_dtype)

    # ---- block-diagonal conv1 weight: (lane, 3k) ---------------------------
    w1_mat = jnp.zeros((m_pad, 3), jnp.float32).at[:M, :].set(
        jnp.transpose(w1.reshape(3, M)).astype(jnp.float32))
    eye_k = jnp.eye(k, dtype=jnp.float32)
    w1_bd = jnp.kron(eye_k, w1_mat).astype(stream_dtype)

    # ---- block-diagonal conv2 weight: (3k, 3k), (in_ch, out_ch) layout -----
    w2_io = jnp.transpose(w2.reshape(3, 3)).astype(jnp.float32)
    w2_bd = jnp.kron(eye_k, w2_io)

    # ---- packed small params (f32) -----------------------------------------
    pk = jnp.zeros((_PK_ROWS, ch), jnp.float32)
    pk = pk.at[_ROW_B1, :].set(jnp.tile(b1.reshape(3).astype(jnp.float32), k))
    pk = pk.at[_ROW_B2, :].set(jnp.tile(b2.reshape(3).astype(jnp.float32), k))
    pk = pk.at[_ROW_WF, :].set(
        jnp.tile(wf.reshape(3).astype(jnp.float32) / H, k))  # fold avg-pool 1/H
    pk = pk.at[_ROW_BF, 0].set(bf.astype(jnp.float32).reshape(-1)[0])

    # ---- 0/1 pooling matrix: sample s owns folded rows [s*fs, (s+1)*fs) ----
    pool_t = jnp.kron(jnp.eye(s_tile, dtype=jnp.float32),
                      jnp.ones((1, fs), jnp.float32))        # (s_tile, f_tile)

    # ---- explicit scoped-VMEM budget (2x headroom, capped for v7x) ---------
    itemsize = jnp.dtype(stream_dtype).itemsize
    x_tile_bytes = f_tile * max(lane, 128) * itemsize
    resid_bytes = (max(lane, 8) * 128 * itemsize      # w1_bd (lane padded)
                   + 128 * 128 * 4                    # w2_bd + pk (lane padded)
                   + s_tile * max(f_tile, 128) * 4)   # pool_t
    inter_bytes = 2 * f_tile * 128 * 4                # y1 / y2 live values
    out_bytes = max(s_tile, 8) * 128 * 4
    needed = 2 * x_tile_bytes + 2 * resid_bytes + inter_bytes + 2 * out_bytes
    vmem_limit = int(min(64 << 20, max(32 << 20, 2 * needed)))

    out = pl.pallas_call(
        _model_cell2_kernel,
        out_shape=jax.ShapeDtypeStruct((n_pad, 1), jnp.float32),
        grid_spec=pltpu.PrefetchScalarGridSpec(
            num_scalar_prefetch=0,
            grid=(num_tiles,),
            in_specs=[
                # Lane-folded rows of s_tile whole samples per grid step.
                pl.BlockSpec((f_tile, lane), lambda i: (i, 0)),
                # Resident (constant index map) weights / params.
                pl.BlockSpec((lane, ch), lambda i: (0, 0)),
                pl.BlockSpec((ch, ch), lambda i: (0, 0)),
                pl.BlockSpec((_PK_ROWS, ch), lambda i: (0, 0)),
                pl.BlockSpec((s_tile, f_tile), lambda i: (0, 0)),
            ],
            # One (s_tile, 1) output block per step -> (N_pad, 1) result.
            out_specs=pl.BlockSpec((s_tile, 1), lambda i: (i, 0)),
        ),
        compiler_params=pltpu.CompilerParams(
            dimension_semantics=("parallel",),   # shards tiles across TCs (v7x)
            vmem_limit_bytes=vmem_limit),
    )(x_folded, w1_bd, w2_bd, pk, pool_t)

    # Drop padded samples; output already has the PyTorch (N, 1) shape.
    return out[:N]


def reference_forward(x_nchw, params):
    """Pure-JAX reference matching the PyTorch eval-mode forward."""
    w1, b1, w2, b2, wf, bf = params
    N, _, H, M = x_nchw.shape
    x = x_nchw.reshape(N, H, M).astype(jnp.float32)
    y1 = jnp.maximum(jnp.einsum("nhm,cm->nhc", x, w1.reshape(3, M)) + b1, 0.0)
    y2 = jnp.maximum(jnp.einsum("nhc,oc->nho", y1, w2.reshape(3, 3)) + b2, 0.0)
    pooled = jnp.mean(y2, axis=1)                       # (N, 3)
    return pooled @ wf.T + bf                           # (N, 1)


if __name__ == "__main__":
    key = jax.random.PRNGKey(0)
    (k_x, k_w1, k_b1, k_w2, k_b2, k_wf, k_bf,
     k_x2, k_w12) = jax.random.split(key, 9)

    # Toy shapes consistent with the module: M = num_markers, H plays the role
    # of the 10000-cell avg-pool window.  N is not a multiple of
    # samples_per_step to exercise whole-sample padding + multi-tile grid.
    N, H, M = 20, 32, 8

    x = jax.random.normal(k_x, (N, 1, H, M), dtype=jnp.float32)
    w1 = jax.random.normal(k_w1, (3, 1, 1, M), dtype=jnp.float32) * 0.1  # cov1 w
    b1 = jax.random.normal(k_b1, (3,), dtype=jnp.float32) * 0.1         # cov1 b
    w2 = jax.random.normal(k_w2, (3, 3, 1, 1), dtype=jnp.float32) * 0.1  # cov2 w
    b2 = jax.random.normal(k_b2, (3,), dtype=jnp.float32) * 0.1         # cov2 b
    wf = jax.random.normal(k_wf, (1, 3), dtype=jnp.float32) * 0.1        # fc1 w
    bf = jax.random.normal(k_bf, (1,), dtype=jnp.float32) * 0.1          # fc1 b
    params = (w1, b1, w2, b2, wf, bf)

    ref = jax.block_until_ready(reference_forward(x, params))

    # f32 streaming, multi-tile grid (tests padding + lane folding + pooling).
    out_f32 = jax.block_until_ready(
        model_cell2_forward(x, params, samples_per_step=8,
                            stream_dtype=jnp.float32))
    assert out_f32.shape == (N, 1)
    assert jnp.allclose(out_f32, ref, atol=1e-4, rtol=1e-4), (out_f32, ref)

    # bf16 HBM streaming of x / conv1 weight; f32 accumulation in-kernel.
    out_bf16 = jax.block_until_ready(
        model_cell2_forward(x, params, samples_per_step=8,
                            stream_dtype=jnp.bfloat16))
    assert jnp.allclose(out_bf16, ref, atol=1e-2, rtol=1e-1), (out_bf16, ref)

    # Non-power-of-two marker count + single-tile path.
    N2, H2, M2 = 6, 16, 5
    x2 = jax.random.normal(k_x2, (N2, 1, H2, M2), dtype=jnp.float32)
    w1_2 = jax.random.normal(k_w12, (3, 1, 1, M2), dtype=jnp.float32) * 0.1
    params2 = (w1_2, b1, w2, b2, wf, bf)
    out2 = jax.block_until_ready(
        model_cell2_forward(x2, params2, samples_per_step=4))
    ref2 = jax.block_until_ready(reference_forward(x2, params2))
    assert out2.shape == (N2, 1)
    assert jnp.allclose(out2, ref2, atol=1e-4, rtol=1e-4), (out2, ref2)

    print("KERNEL_OK")
</pallas_src>

<mosaic_0001>
module attributes {stable_mosaic.version = 11 : i64} {
  func.func @_model_cell2_kernel(%arg0: i32, %arg1: memref<16x128xf32, #tpu.memory_space<vmem>>, %arg2: memref<128x48xf32, #tpu.memory_space<vmem>>, %arg3: memref<48x48xf32, #tpu.memory_space<vmem>>, %arg4: memref<8x48xf32, #tpu.memory_space<vmem>>, %arg5: memref<8x16xf32, #tpu.memory_space<vmem>>, %arg6: memref<8x1xf32, #tpu.memory_space<vmem>>) attributes {dimension_semantics = [#tpu.dimension_semantics<parallel>], iteration_bounds = array<i64: 3>, scalar_prefetch = 0 : i64, scratch_operands = 0 : i64, tpu.core_type = #tpu.core_type<tc>, window_params = [{transform_indices = @transform_0, window_bounds = array<i64: 16, 128>}, {pipeline_mode = #tpu.pipeline_mode<synchronous>, transform_indices = @transform_1, window_bounds = array<i64: 128, 48>}, {pipeline_mode = #tpu.pipeline_mode<synchronous>, transform_indices = @transform_2, window_bounds = array<i64: 48, 48>}, {pipeline_mode = #tpu.pipeline_mode<synchronous>, transform_indices = @transform_3, window_bounds = array<i64: 8, 48>}, {pipeline_mode = #tpu.pipeline_mode<synchronous>, transform_indices = @transform_4, window_bounds = array<i64: 8, 16>}, {transform_indices = @transform_5, window_bounds = array<i64: 8, 1>}]} {
    %c0 = arith.constant 0 : index
    %c0_0 = arith.constant 0 : index
    %0 = vector.load %arg4[%c0, %c0_0] : memref<8x48xf32, #tpu.memory_space<vmem>>, vector<1x48xf32>
    %c1 = arith.constant 1 : index
    %c0_1 = arith.constant 0 : index
    %1 = vector.load %arg4[%c1, %c0_1] : memref<8x48xf32, #tpu.memory_space<vmem>>, vector<1x48xf32>
    %c2 = arith.constant 2 : index
    %c0_2 = arith.constant 0 : index
    %2 = vector.load %arg4[%c2, %c0_2] : memref<8x48xf32, #tpu.memory_space<vmem>>, vector<1x48xf32>
    %c3 = arith.constant 3 : index
    %c0_3 = arith.constant 0 : index
    %3 = vector.load %arg4[%c3, %c0_3] : memref<8x48xf32, #tpu.memory_space<vmem>>, vector<1x1xf32>
    %c0_4 = arith.constant 0 : index
    %c0_5 = arith.constant 0 : index
    %4 = vector.load %arg1[%c0_4, %c0_5] : memref<16x128xf32, #tpu.memory_space<vmem>>, vector<16x128xf32>
    %c0_6 = arith.constant 0 : index
    %c0_7 = arith.constant 0 : index
    %5 = vector.load %arg2[%c0_6, %c0_7] : memref<128x48xf32, #tpu.memory_space<vmem>>, vector<128x48xf32>
    %cst = arith.constant dense<0.000000e+00> : vector<16x48xf32>
    %6 = tpu.matmul %4, %5, %cst {dimension_numbers = #tpu.dot_dimension_numbers<[1], [0], [0], [1], [0, 0, 1, 1], [], []>} : vector<16x128xf32>, vector<128x48xf32>, vector<16x48xf32> -> vector<16x48xf32>
    %7 = vector.broadcast %0 : vector<1x48xf32> to vector<16x48xf32>
    %8 = arith.addf %6, %7 : vector<16x48xf32>
    %cst_8 = arith.constant 0.000000e+00 : f32
    %9 = vector.broadcast %cst_8 : f32 to vector<16x48xf32>
    %10 = arith.maximumf %8, %9 : vector<16x48xf32>
    %c0_9 = arith.constant 0 : index
    %c0_10 = arith.constant 0 : index
    %11 = vector.load %arg3[%c0_9, %c0_10] : memref<48x48xf32, #tpu.memory_space<vmem>>, vector<48x48xf32>
    %cst_11 = arith.constant dense<0.000000e+00> : vector<16x48xf32>
    %12 = tpu.matmul %10, %11, %cst_11 {dimension_numbers = #tpu.dot_dimension_numbers<[1], [0], [0], [1], [0, 0, 1, 1], [], []>} : vector<16x48xf32>, vector<48x48xf32>, vector<16x48xf32> -> vector<16x48xf32>
    %13 = vector.broadcast %1 : vector<1x48xf32> to vector<16x48xf32>
    %14 = arith.addf %12, %13 : vector<16x48xf32>
    %cst_12 = arith.constant 0.000000e+00 : f32
    %15 = vector.broadcast %cst_12 : f32 to vector<16x48xf32>
    %16 = arith.maximumf %14, %15 : vector<16x48xf32>
    %c0_13 = arith.constant 0 : index
    %c0_14 = arith.constant 0 : index
    %17 = vector.load %arg5[%c0_13, %c0_14] : memref<8x16xf32, #tpu.memory_space<vmem>>, vector<8x16xf32>
    %cst_15 = arith.constant dense<0.000000e+00> : vector<8x48xf32>
    %18 = tpu.matmul %17, %16, %cst_15 {dimension_numbers = #tpu.dot_dimension_numbers<[1], [0], [0], [1], [0, 0, 1, 1], [], []>} : vector<8x16xf32>, vector<16x48xf32>, vector<8x48xf32> -> vector<8x48xf32>
    %19 = vector.broadcast %2 : vector<1x48xf32> to vector<8x48xf32>
    %20 = arith.mulf %18, %19 : vector<8x48xf32>
    %cst_16 = arith.constant dense<0.000000e+00> : vector<8xf32>
    %21 = vector.multi_reduction <add>, %20, %cst_16 [1] : vector<8x48xf32> to vector<8xf32>
    %22 = vector.shape_cast %21 : vector<8xf32> to vector<8x1xf32>
    %23 = vector.broadcast %3 : vector<1x1xf32> to vector<8x1xf32>
    %24 = arith.addf %22, %23 : vector<8x1xf32>
    %c0_17 = arith.constant 0 : index
    %c0_18 = arith.constant 0 : index
    %25 = vector.load %arg6[%c0_17, %c0_18] : memref<8x1xf32, #tpu.memory_space<vmem>>, vector<8x1xf32>
    tpu.vector_store %arg6[%c0_17, %c0_18], %24 {strides = array<i32>} : memref<8x1xf32, #tpu.memory_space<vmem>>, vector<8x1xf32>,
    return
  }
  func.func @transform_0(%arg0: i32) -> (i32, i32) {
    %c0_i32 = arith.constant 0 : i32
    %c0_i32_0 = arith.constant 0 : i32
    return %arg0, %c0_i32 : i32, i32
  }
  func.func @transform_1(%arg0: i32) -> (i32, i32) {
    %c0_i32 = arith.constant 0 : i32
    %c0_i32_0 = arith.constant 0 : i32
    %c0_i32_1 = arith.constant 0 : i32
    return %c0_i32, %c0_i32_0 : i32, i32
  }
  func.func @transform_2(%arg0: i32) -> (i32, i32) {
    %c0_i32 = arith.constant 0 : i32
    %c0_i32_0 = arith.constant 0 : i32
    %c0_i32_1 = arith.constant 0 : i32
    return %c0_i32, %c0_i32_0 : i32, i32
  }
  func.func @transform_3(%arg0: i32) -> (i32, i32) {
    %c0_i32 = arith.constant 0 : i32
    %c0_i32_0 = arith.constant 0 : i32
    %c0_i32_1 = arith.constant 0 : i32
    return %c0_i32, %c0_i32_0 : i32, i32
  }
  func.func @transform_4(%arg0: i32) -> (i32, i32) {
    %c0_i32 = arith.constant 0 : i32
    %c0_i32_0 = arith.constant 0 : i32
    %c0_i32_1 = arith.constant 0 : i32
    return %c0_i32, %c0_i32_0 : i32, i32
  }
  func.func @transform_5(%arg0: i32) -> (i32, i32) {
    %c0_i32 = arith.constant 0 : i32
    %c0_i32_0 = arith.constant 0 : i32
    return %arg0, %c0_i32 : i32, i32
  }
}

</mosaic_0001>

<llo_original>
// kernel: tpu_custom_call.1
$region0: #{tpu_custom_call.1}
  #allocation0 [shape = 'u32[]', space=smem, size = 0x4, offset = 0x4, fixed_abs, tag = 'smem constant byte address 0x4 - core index']
  #allocation1 [shape = 'u32[72,128]{1,0:T(1,128)}', space=vmem, size = 0x9000, scoped, tag = 'internal scratch']
  %s0 = inlined_call_operand.vmem [shape: f32[48,128], index: 0, kind: input, shape index: {}]
  %s1 = inlined_call_operand.vmem [shape: f32[128,48], index: 1, kind: input, shape index: {}]
  %s2 = inlined_call_operand.vmem [shape: f32[48,48], index: 2, kind: input, shape index: {}]
  %s3 = inlined_call_operand.vmem [shape: f32[8,48], index: 3, kind: input, shape index: {}]
  %s4 = inlined_call_operand.vmem [shape: f32[8,16], index: 4, kind: input, shape index: {}]
  %s5 = inlined_call_operand.vmem [shape: f32[24,1], index: 5, kind: output, shape index: {}]
  %s6 = sld [smem:[#allocation0]]
  $region53: #{tpu_custom_call.1} parent=0
    _
  %s8 = ssub.s32 1, %s6
  %s9 = scalar_select 0, %s8, %s6
  loop: start=0, step=1, limit=5
  $region2: #{tpu_custom_call.1} parent=0 // loop_pre_header
    _
  $region3: #{tpu_custom_call.1} parent=0 // loop_header
    %s11 = sphi 0, %s15
    %p12 = scmp.ge.s32.totalorder %s11, 5
    %s21 = sphi 0, %s23
    %s24 = sphi 0, %s21
    %s25 = sphi 0, %s24
    %s41 = sphi 0, %s25
    %s45 = sphi 0, %s45
    %s47 = sphi 0, %s45
    %s48 = sphi 0, %s47
    %s62 = sphi 0, %s48
    %s66 = sphi 0, %s66
    %s68 = sphi 0, %s66
    %s69 = sphi 0, %s68
    %s83 = sphi 0, %s69
    %s87 = sphi 0, %s87
    %s89 = sphi 0, %s87
    %s90 = sphi 0, %s89
    %s104 = sphi 0, %s90
    %s108 = sphi 0, %s108
    %s110 = sphi 0, %s108
    %s111 = sphi 0, %s110
    %s125 = sphi 0, %s111
    %s131 = sphi 0, %s133
    %s134 = sphi 0, %s131
    %s135 = sphi 0, %s134
    %s151 = sphi 0, %s135
  $region4: #{tpu_custom_call.1} parent=0 // loop_header_branch
    %14 = sbr.rel (%p12) target = $region8
  $region5: #{tpu_custom_call.1} parent=0 // loop_body
    %s16 = ssub.s32 %s11, 1
    %s17 = ssub.s32 %s11, 2
    %s18 = sadd.s32 %s11, 1
    %s19 = ssub.s32 %s11, %s18
    %p20 = scmp.eq.s32.totalorder %s19, 0
    %s22 = sadd.s32 %s21, 1
    %s23 = scalar_select %p20, %s21, %s22
    %p26 = pneg %p20
    %p27 = scmp.eq.s32.totalorder %s11, 2
    %p28 = por %p26, %p27
    %p29 = scmp.ne.s32.totalorder %s21, %s24
    %p30 = scmp.eq.s32.totalorder %s11, 0
    %p31 = por %p29, %p30
    %p32 = scmp.ne.s32.totalorder %s21, %s24
    %p33 = scmp.eq.s32.totalorder %s16, 2
    %p34 = por %p32, %p33
    %p35 = scmp.ne.s32.totalorder %s24, %s25
    %p36 = scmp.eq.s32.totalorder %s16, 0
    %p37 = por %p35, %p36
    %p38 = scmp.ne.s32.totalorder %s24, %s25
    %p39 = scmp.eq.s32.totalorder %s17, 2
    %p40 = por %p38, %p39
    %p42 = scmp.ne.s32.totalorder %s25, %s41
    %p43 = scmp.eq.s32.totalorder %s17, 0
    %p44 = por %p42, %p43
    %s46 = sadd.s32 %s45, 1
    %p49 = scmp.eq.s32.totalorder %s11, 2
    %p50 = scmp.ne.s32.totalorder %s45, %s47
    %p51 = scmp.eq.s32.totalorder %s11, 0
    %p52 = por %p50, %p51
    %p53 = scmp.ne.s32.totalorder %s45, %s47
    %p54 = scmp.eq.s32.totalorder %s16, 2
    %p55 = por %p53, %p54
    %p56 = scmp.ne.s32.totalorder %s47, %s48
    %p57 = scmp.eq.s32.totalorder %s16, 0
    %p58 = por %p56, %p57
    %p59 = scmp.ne.s32.totalorder %s47, %s48
    %p60 = scmp.eq.s32.totalorder %s17, 2
    %p61 = por %p59, %p60
    %p63 = scmp.ne.s32.totalorder %s48, %s62
    %p64 = scmp.eq.s32.totalorder %s17, 0
    %p65 = por %p63, %p64
    %s67 = sadd.s32 %s66, 1
    %p70 = scmp.eq.s32.totalorder %s11, 2
    %p71 = scmp.ne.s32.totalorder %s66, %s68
    %p72 = scmp.eq.s32.totalorder %s11, 0
    %p73 = por %p71, %p72
    %p74 = scmp.ne.s32.totalorder %s66, %s68
    %p75 = scmp.eq.s32.totalorder %s16, 2
    %p76 = por %p74, %p75
    %p77 = scmp.ne.s32.totalorder %s68, %s69
    %p78 = scmp.eq.s32.totalorder %s16, 0
    %p79 = por %p77, %p78
    %p80 = scmp.ne.s32.totalorder %s68, %s69
    %p81 = scmp.eq.s32.totalorder %s17, 2
    %p82 = por %p80, %p81
    %p84 = scmp.ne.s32.totalorder %s69, %s83
    %p85 = scmp.eq.s32.totalorder %s17, 0
    %p86 = por %p84, %p85
    %s88 = sadd.s32 %s87, 1
    %p91 = scmp.eq.s32.totalorder %s11, 2
    %p92 = scmp.ne.s32.totalorder %s87, %s89
    %p93 = scmp.eq.s32.totalorder %s11, 0
    %p94 = por %p92, %p93
    %p95 = scmp.ne.s32.totalorder %s87, %s89
    %p96 = scmp.eq.s32.totalorder %s16, 2
    %p97 = por %p95, %p96
    %p98 = scmp.ne.s32.totalorder %s89, %s90
    %p99 = scmp.eq.s32.totalorder %s16, 0
    %p100 = por %p98, %p99
    %p101 = scmp.ne.s32.totalorder %s89, %s90
    %p102 = scmp.eq.s32.totalorder %s17, 2
    %p103 = por %p101, %p102
    %p105 = scmp.ne.s32.totalorder %s90, %s104
    %p106 = scmp.eq.s32.totalorder %s17, 0
    %p107 = por %p105, %p106
    %s109 = sadd.s32 %s108, 1
    %p112 = scmp.eq.s32.totalorder %s11, 2
    %p113 = scmp.ne.s32.totalorder %s108, %s110
    %p114 = scmp.eq.s32.totalorder %s11, 0
    %p115 = por %p113, %p114
    %p116 = scmp.ne.s32.totalorder %s108, %s110
    %p117 = scmp.eq.s32.totalorder %s16, 2
    %p118 = por %p116, %p117
    %p119 = scmp.ne.s32.totalorder %s110, %s111
    %p120 = scmp.eq.s32.totalorder %s16, 0
    %p121 = por %p119, %p120
    %p122 = scmp.ne.s32.totalorder %s110, %s111
    %p123 = scmp.eq.s32.totalorder %s17, 2
    %p124 = por %p122, %p123
    %p126 = scmp.ne.s32.totalorder %s111, %s125
    %p127 = scmp.eq.s32.totalorder %s17, 0
    %p128 = por %p126, %p127
    %s129 = ssub.s32 %s11, %s18
    %p130 = scmp.eq.s32.totalorder %s129, 0
    %s132 = sadd.s32 %s131, 1
    %s133 = scalar_select %p130, %s131, %s132
    %p136 = pneg %p130
    %p137 = scmp.eq.s32.totalorder %s11, 2
    %p138 = por %p136, %p137
    %p139 = scmp.ne.s32.totalorder %s131, %s134
    %p140 = scmp.eq.s32.totalorder %s11, 0
    %p141 = por %p139, %p140
    %p142 = scmp.ne.s32.totalorder %s131, %s134
    %p143 = scmp.eq.s32.totalorder %s16, 2
    %p144 = por %p142, %p143
    %p145 = scmp.ne.s32.totalorder %s134, %s135
    %p146 = scmp.eq.s32.totalorder %s16, 0
    %p147 = por %p145, %p146
    %p148 = scmp.ne.s32.totalorder %s134, %s135
    %p149 = scmp.eq.s32.totalorder %s17, 2
    %p150 = por %p148, %p149
    %p152 = scmp.ne.s32.totalorder %s135, %s151
    %p153 = scmp.eq.s32.totalorder %s17, 0
    %p154 = por %p152, %p153
    %p155 = scmp.le.s32.totalorder 1, %s11
    %p156 = scmp.lt.s32.totalorder %s11, 4
    %p157 = pnand %p155, %p156
    %p158 = pneg %p157
    // Predicated region
    $region9: #{tpu_custom_call.1} parent=5 // pred_check
      _
    $region10: #{tpu_custom_call.1} parent=5 // pred_check_branch
      %160 = sbr.rel (%p157) target = $region12
    $region11: #{tpu_custom_call.1} parent=5 // pred_region
      %s161 = ssub.s32 %s11, 1
      // Predicated region
      $region13: #{tpu_custom_call.1} parent=11 // pred_check
        %p162 = pneg %p58
      $region14: #{tpu_custom_call.1} parent=11 // pred_check_branch
        %164 = sbr.rel (%p162) target = $region16
      $region15: #{tpu_custom_call.1} parent=11 // pred_region
        _
      $region16: #{tpu_custom_call.1} parent=11 // pred_fallthru
        _
      // Predicated region
      $region17: #{tpu_custom_call.1} parent=11 // pred_check
        %p165 = pneg %p79
      $region18: #{tpu_custom_call.1} parent=11 // pred_check_branch
        %167 = sbr.rel (%p165) target = $region20
      $region19: #{tpu_custom_call.1} parent=11 // pred_region
        _
      $region20: #{tpu_custom_call.1} parent=11 // pred_fallthru
        _
      // Predicated region
      $region21: #{tpu_custom_call.1} parent=11 // pred_check
        %p168 = pneg %p100
      $region22: #{tpu_custom_call.1} parent=11 // pred_check_branch
        %170 = sbr.rel (%p168) target = $region24
      $region23: #{tpu_custom_call.1} parent=11 // pred_region
        _
      $region24: #{tpu_custom_call.1} parent=11 // pred_fallthru
        _
      // Predicated region
      $region25: #{tpu_custom_call.1} parent=11 // pred_check
        %p171 = pneg %p121
      $region26: #{tpu_custom_call.1} parent=11 // pred_check_branch
        %173 = sbr.rel (%p171) target = $region28
      $region27: #{tpu_custom_call.1} parent=11 // pred_region
        _
      $region28: #{tpu_custom_call.1} parent=11 // pred_fallthru
        _
    $region12: #{tpu_custom_call.1} parent=5 // pred_fallthru
      _
    %p174 = scmp.lt.s32.totalorder %s11, 3
    // Predicated region
    $region29: #{tpu_custom_call.1} parent=5 // pred_check
      %p175 = pneg %p174
    $region30: #{tpu_custom_call.1} parent=5 // pred_check_branch
      %177 = sbr.rel (%p175) target = $region32
    $region31: #{tpu_custom_call.1} parent=5 // pred_region
      // Predicated region
      $region33: #{tpu_custom_call.1} parent=31 // pred_check
        %p178 = pneg %p31
      $region34: #{tpu_custom_call.1} parent=31 // pred_check_branch
        %180 = sbr.rel (%p178) target = $region36
      $region35: #{tpu_custom_call.1} parent=31 // pred_region
        %s181 = smul.u32 2, %s11
        %p182 = scmp.lt.s32.totalorder %s181, 5
        %s183 = scalar_select %p182, %s181, 5
        %s184 = smul.addr %s183, 8
        %s185 = scalar_lea.vmem %s0, %s184
        %s186 = smul.u32 2, %s11
      $region36: #{tpu_custom_call.1} parent=31 // pred_fallthru
        _
    $region32: #{tpu_custom_call.1} parent=5 // pred_fallthru
      _
    %p187 = scmp.le.s32.totalorder 1, %s11
    %p188 = scmp.lt.s32.totalorder %s11, 4
    %p189 = pnand %p187, %p188
    %p190 = pneg %p189
    // Predicated region
    $region37: #{tpu_custom_call.1} parent=5 // pred_check
      _
    $region38: #{tpu_custom_call.1} parent=5 // pred_check_branch
      %192 = sbr.rel (%p189) target = $region40
    $region39: #{tpu_custom_call.1} parent=5 // pred_region
      %s193 = ssub.s32 %s11, 1
      %s194 = smul.u32 2, %s16
      %p195 = scmp.lt.s32.totalorder %s194, 5
      %s196 = scalar_select %p195, %s194, 5
      %s197 = smul.addr %s196, 8
      %s198 = scalar_lea.vmem %s0, %s197
      %p199 = pneg %p37
      %p200 = pneg %p34
      %p201 = pneg %p58
      %p202 = pneg %p55
      %p203 = pneg %p79
      %p204 = pneg %p76
      %p205 = pneg %p100
      %p206 = pneg %p97
      %p207 = pneg %p121
      %p208 = pneg %p118
      %p209 = pneg %p147
      %p210 = pneg %p144
      %p211 = scmp.lt.s32.totalorder %s16, 2
      %s212 = scalar_select %p211, %s16, 2
      %s213 = smul.addr %s212, 8
      %s214 = scalar_lea.vmem %s5, %s213
      %s215 = smul.u32 2, %s16
      %p216 = scmp.lt.s32.totalorder %s215, 5
      %s217 = scalar_select %p216, %s215, 5
      %s218 = smul.addr %s217, 8
      %s219 = scalar_lea.vmem %s0, %s218
      %s220 = smul.u32 2, %s16
      %p221 = scmp.lt.s32.totalorder %s16, 2
      %s222 = scalar_select %p221, %s16, 2
      %s223 = smul.addr %s222, 8
      %s224 = scalar_lea.vmem %s5, %s223
      %v225 = vld [vmem:[%s3] sm:$0x1]
      %v226 = vld [vmem:[%s3 + $0x1] sm:$0x1]
      %v227 = vld [vmem:[%s3 + $0x2] sm:$0x1]
      %v228 = vld [vmem:[%s3 + $0x3] sm:$0x1]
      %v229 = vld [vmem:[%s219] sm:$0xff]
      %v230 = vld [vmem:[%s219 + $0x8] sm:$0xff]
      %v231 = vld [vmem:[%s1] sm:$0xff]
      %v232 = vld [vmem:[%s1 + $0x8] sm:$0xff]
      %v233 = vld [vmem:[%s1 + $0x10] sm:$0xff]
      %v234 = vld [vmem:[%s1 + $0x18] sm:$0xff]
      %v235 = vld [vmem:[%s1 + $0x20] sm:$0xff]
      %v236 = vld [vmem:[%s1 + $0x28] sm:$0xff]
      %v237 = vld [vmem:[%s1 + $0x30] sm:$0xff]
      %v238 = vld [vmem:[%s1 + $0x38] sm:$0xff]
      %v239 = vld [vmem:[%s1 + $0x40] sm:$0xff]
      %v240 = vld [vmem:[%s1 + $0x48] sm:$0xff]
      %v241 = vld [vmem:[%s1 + $0x50] sm:$0xff]
      %v242 = vld [vmem:[%s1 + $0x58] sm:$0xff]
      %v243 = vld [vmem:[%s1 + $0x60] sm:$0xff]
      %v244 = vld [vmem:[%s1 + $0x68] sm:$0xff]
      %v245 = vld [vmem:[%s1 + $0x70] sm:$0xff]
      %v246 = vld [vmem:[%s1 + $0x78] sm:$0xff]
      %v247 = vperm.slane %v225, 0
      %248 = vmatpush.msra.mxu0 %v246
      %249 = vmatpush.msra.mxu0 %v245
      %250 = vmatpush.msra.mxu0 %v244
      %251 = vmatpush.msra.mxu0 %v243
      %252 = vmatpush.msra.mxu0 %v242
      %253 = vmatpush.msra.mxu0 %v241
      %254 = vmatpush.msra.mxu0 %v240
      %255 = vmatpush.msra.mxu0 %v239
      %256 = vmatpush.msra.mxu0 %v238
      %257 = vmatpush.msra.mxu0 %v237
      %258 = vmatpush.msra.mxu0 %v236
      %259 = vmatpush.msra.mxu0 %v235
      %260 = vmatpush.msra.mxu0 %v234
      %261 = vmatpush.msra.mxu0 %v233
      %262 = vmatpush.msra.mxu0 %v232
      %263 = vmatpush.msra.mxu0 %v231
      %264 = vmatmul.f32.gmra.mxu0 %v229
      %v265 = vpop.f32.mrf.mxu0
      %v266 = vadd.f32 %v247, %v265
      %267 = vmatmul.f32.gmra.mxu0 %v230
      %v268 = vpop.f32.mrf.mxu0
      %v269 = vadd.f32 %v247, %v268
      %270 = vdwg.mxu0
      %v271 = vmax.f32 %v266, 0.0
      %v272 = vmax.f32 %v269, 0.0
      %v273 = vld [vmem:[%s2] sm:$0xff]
      %v274 = vld [vmem:[%s2 + $0x8] sm:$0xff]
      %v275 = vld [vmem:[%s2 + $0x10] sm:$0xff]
      %v276 = vld [vmem:[%s2 + $0x18] sm:$0xff]
      %v277 = vld [vmem:[%s2 + $0x20] sm:$0xff]
      %v278 = vld [vmem:[%s2 + $0x28] sm:$0xff]
      %v279 = vperm.slane %v226, 0
      %vm280 = vcmask 392192
      %v282 = vsel %vm280, %v271, 0
      %v285 = vsel %vm280, %v272, 0
      %287 = vmatpush.msra.mxu0 0.0
      %288 = vmatpush.msra.mxu0 0.0
      %289 = vmatpush.msra.mxu0 0.0
      %290 = vmatpush.msra.mxu0 0.0
      %291 = vmatpush.msra.mxu0 0.0
      %292 = vmatpush.msra.mxu0 0.0
      %293 = vmatpush.msra.mxu0 0.0
      %294 = vmatpush.msra.mxu0 0.0
      %295 = vmatpush.msra.mxu0 0.0
      %296 = vmatpush.msra.mxu0 0.0
      %297 = vmatpush.msra.mxu0 %v278
      %298 = vmatpush.msra.mxu0 %v277
      %299 = vmatpush.msra.mxu0 %v276
      %300 = vmatpush.msra.mxu0 %v275
      %301 = vmatpush.msra.mxu0 %v274
      %302 = vmatpush.msra.mxu0 %v273
      %303 = vmatmul.f32.gmra.mxu0 %v282
      %v304 = vpop.f32.mrf.mxu0
      %v305 = vadd.f32 %v279, %v304
      %306 = vmatmul.f32.gmra.mxu0 %v285
      %v307 = vpop.f32.mrf.mxu0
      %v308 = vadd.f32 %v279, %v307
      %309 = vdwg.mxu0
      %v310 = vmax.f32 %v305, 0.0
      %v311 = vmax.f32 %v308, 0.0
      %v312 = vld [vmem:[%s4] sm:$0xff]
      %vm313 = vcmask 130048
      %v315 = vsel %vm313, %v312, 0
      %317 = vmatpush.msra.mxu0 0.0
      %318 = vmatpush.msra.mxu0 0.0
      %319 = vmatpush.msra.mxu0 0.0
      %320 = vmatpush.msra.mxu0 0.0
      %321 = vmatpush.msra.mxu0 0.0
      %322 = vmatpush.msra.mxu0 0.0
      %323 = vmatpush.msra.mxu0 0.0
      %324 = vmatpush.msra.mxu0 0.0
      %325 = vmatpush.msra.mxu0 0.0
      %326 = vmatpush.msra.mxu0 0.0
      %327 = vmatpush.msra.mxu0 0.0
      %328 = vmatpush.msra.mxu0 0.0
      %329 = vmatpush.msra.mxu0 0.0
      %330 = vmatpush.msra.mxu0 0.0
      %331 = vmatpush.msra.mxu0 %v311
      %332 = vmatpush.msra.mxu0 %v310
      %333 = vmatmul.f32.gmra.mxu0 %v315
      %v334 = vpop.f32.mrf.mxu0
      %v335 = vadd.f32 0.0, %v334
      %336 = vdwg.mxu0
      %v337 = vperm.slane %v227, 0
      %v338 = vmul.f32 %v335, %v337
      %v339 = vsel %vm280, %v338, 0.0
      %340 = vadd.xlane.f32.xlu0 %v339
      %v341 = vpop.xlane.xlu0 %340
      %v342 = vperm.slane %v228, 0
      %v343 = vadd.f32 %v341, %v342
      %vm344 = vcmask 7168
      %345 = vst.msk [vmem:[%s224] sm:$0xff] %vm344, %v343
      %p346 = scmp.lt.s32.totalorder %s16, 2
      %s347 = scalar_select %p346, %s16, 2
      %s348 = smul.addr %s347, 8
      %s349 = scalar_lea.vmem %s5, %s348
      // Predicated region
      $region41: #{tpu_custom_call.1} parent=39 // pred_check
        %p350 = pneg %p144
      $region42: #{tpu_custom_call.1} parent=39 // pred_check_branch
        %352 = sbr.rel (%p350) target = $region44
      $region43: #{tpu_custom_call.1} parent=39 // pred_region
        _
      $region44: #{tpu_custom_call.1} parent=39 // pred_fallthru
        _
    $region40: #{tpu_custom_call.1} parent=5 // pred_fallthru
      _
    %p353 = scmp.le.s32.totalorder 2, %s11
    // Predicated region
    $region45: #{tpu_custom_call.1} parent=5 // pred_check
      %p354 = pneg %p353
    $region46: #{tpu_custom_call.1} parent=5 // pred_check_branch
      %356 = sbr.rel (%p354) target = $region48
    $region47: #{tpu_custom_call.1} parent=5 // pred_region
      %s357 = ssub.s32 %s11, 2
      // Predicated region
      $region49: #{tpu_custom_call.1} parent=47 // pred_check
        %p358 = pneg %p150
      $region50: #{tpu_custom_call.1} parent=47 // pred_check_branch
        %360 = sbr.rel (%p358) target = $region52
      $region51: #{tpu_custom_call.1} parent=47 // pred_region
        %p361 = scmp.lt.s32.totalorder %s17, 2
        %s362 = scalar_select %p361, %s17, 2
        %s363 = smul.addr %s362, 8
        %s364 = scalar_lea.vmem %s5, %s363
      $region52: #{tpu_custom_call.1} parent=47 // pred_fallthru
        _
    $region48: #{tpu_custom_call.1} parent=5 // pred_fallthru
      _
  $region6: #{tpu_custom_call.1} parent=0 // loop_footer
    %s15 = sadd.s32 1, %s11
  $region7: #{tpu_custom_call.1} parent=0 // loop_footer_branch
    %10 = sbr.rel target = $region3
  $region8: #{tpu_custom_call.1} parent=0 // loop_exit
    _

</llo_original>
